<compile_context>
chip_gen: v5e
topology: v5e:2x2
jax: 0.10.0
libtpu: 0.0.40
codegen_flags: <defaults>
</compile_context>

<pallas_src>
import functools
import math

import jax
import jax.numpy as jnp
from jax.experimental import pallas as pl
from jax.experimental.pallas import tpu as pltpu


def _round_up(x, m):
    return ((x + m - 1) // m) * m


# -----------------------------------------------------------------------------
# Pallas kernel: fg rasterization + depth binning + focal loss + per-tile sums
# -----------------------------------------------------------------------------
def _ddn_loss_kernel(boxes_ref, logits_ref, depth_ref, out_ref, *,
                     mode, gamma, depth_min, depth_max, num_bins,
                     num_boxes, width, hw, tile):
    b = pl.program_id(0)
    i = pl.program_id(1)

    x = logits_ref[...].astype(jnp.float32)        # (C, T): C on sublanes, T on lanes
    d = depth_ref[...].astype(jnp.float32)         # (1, T)

    # Per-lane pixel index; mask for the (possibly partial) last tile.
    lane = jax.lax.broadcasted_iota(jnp.int32, (1, tile), 1)
    pix = i * tile + lane                          # (1, T) int32
    valid = pix < hw                               # (1, T) bool

    # ---- in-kernel foreground rasterization from SMEM-prefetched 2D boxes ----
    # u = pix % W, v = pix // W done in f32 (+0.5 guards the floor at exact
    # multiples of W; exact for any realistic H*W < 2^24).
    pix_f = pix.astype(jnp.float32)
    w_f = jnp.float32(width)
    v_row = jnp.floor((pix_f + 0.5) / w_f)         # (1, T)
    u_col = pix_f - v_row * w_f                    # (1, T)
    fg = jnp.zeros((1, tile), dtype=jnp.bool_)
    base = b * (num_boxes * 4)
    for n in range(num_boxes):                     # N is small & static -> unrolled
        off = base + n * 4
        u1 = boxes_ref[off + 0].astype(jnp.float32)
        v1 = boxes_ref[off + 1].astype(jnp.float32)
        u2 = boxes_ref[off + 2].astype(jnp.float32)
        v2 = boxes_ref[off + 3].astype(jnp.float32)
        fg = fg | ((u_col >= u1) & (u_col < u2) & (v_row >= v1) & (v_row < v2))

    # ---- transform_utils.bin_depths(..., target=True) ----
    if mode == "UD":
        bin_size = (depth_max - depth_min) / num_bins
        idx_f = (d - depth_min) / bin_size
    elif mode == "LID":
        bin_size = 2.0 * (depth_max - depth_min) / (num_bins * (1.0 + num_bins))
        idx_f = -0.5 + 0.5 * jnp.sqrt(1.0 + 8.0 * (d - depth_min) / bin_size)
    elif mode == "SID":
        idx_f = num_bins * (jnp.log(1.0 + d) - math.log(1.0 + depth_min)) / (
            math.log(1.0 + depth_max) - math.log(1.0 + depth_min))
    else:
        raise NotImplementedError(mode)
    invalid = (idx_f < 0.0) | (idx_f > num_bins) | (~jnp.isfinite(idx_f))
    target = jnp.where(invalid, jnp.float32(num_bins),
                       jnp.floor(idx_f)).astype(jnp.int32)          # (1, T)

    # ---- FocalLoss(alpha, gamma, reduction='none'); alpha folded into wrapper ----
    m = jnp.max(x, axis=0, keepdims=True)          # (1, T)
    sh = x - m                                     # (C, T)
    e = jnp.exp(sh)                                # (C, T)  EUP
    s = jnp.sum(e, axis=0, keepdims=True)          # (1, T)
    inv = pl.reciprocal(s, approx=True)            # EUP slot, off the VALU path
    p = e * inv                                    # softmax (no +1e-8; <=1e-3 tol)
    logp = sh - jnp.log(s)                         # exact log-softmax
    omp = 1.0 - p
    if float(gamma) == 2.0:
        w = omp * omp                              # avoid pow() on EUP
    elif float(gamma) == 1.0:
        w = omp
    else:
        w = jnp.power(jnp.maximum(omp, 0.0), gamma)   # clamp: approx recip -> p>1 by eps
    focal = -(w * logp)                            # (C, T), alpha applied in wrapper

    cls = jax.lax.broadcasted_iota(jnp.int32, (num_bins + 1, tile), 0)
    one_hot = (cls == target).astype(jnp.float32) + 1e-6   # kornia one_hot eps
    loss_px = jnp.sum(one_hot * focal, axis=0, keepdims=True)       # (1, T)

    # ---- Balancer fg/bg split; zero masked lanes BEFORE any multiply (kills NaN) ----
    loss_px = jnp.where(valid, loss_px, 0.0)
    fg_f = (valid & fg).astype(jnp.float32)
    bg_f = (valid & (~fg)).astype(jnp.float32)     # bg derived in-kernel
    fg_s = jnp.sum(loss_px * fg_f, axis=-1, keepdims=True)   # (1, 1)
    bg_s = jnp.sum(loss_px * bg_f, axis=-1, keepdims=True)   # (1, 1)

    # Per-tile partial sums packed into an (8,128) output block (lane 0 = fg,
    # lane 1 = bg, rest zero); both grid axes stay "parallel".
    sub = jax.lax.broadcasted_iota(jnp.int32, (8, 128), 0)
    ln = jax.lax.broadcasted_iota(jnp.int32, (8, 128), 1)
    blk = (jnp.where((sub == 0) & (ln == 0), fg_s, 0.0)
           + jnp.where((sub == 0) & (ln == 1), bg_s, 0.0))
    out_ref[0] = blk


# -----------------------------------------------------------------------------
# Foreground mask from 2D boxes (plain JAX — reference path only)
# -----------------------------------------------------------------------------
def compute_fg_mask(gt_boxes2d, shape, downsample_factor):
    B, H, W = shape
    boxes = gt_boxes2d / downsample_factor
    u1 = jnp.floor(boxes[..., 0])
    v1 = jnp.floor(boxes[..., 1])
    u2 = jnp.ceil(boxes[..., 2])
    v2 = jnp.ceil(boxes[..., 3])
    vs = jnp.arange(H, dtype=jnp.float32)
    us = jnp.arange(W, dtype=jnp.float32)
    in_v = (vs[None, None, :] >= v1[..., None]) & (vs[None, None, :] < v2[..., None])  # (B,N,H)
    in_u = (us[None, None, :] >= u1[..., None]) & (us[None, None, :] < u2[..., None])  # (B,N,W)
    return jnp.any(in_v[:, :, :, None] & in_u[:, :, None, :], axis=1)                 # (B,H,W)


# -----------------------------------------------------------------------------
# DDNLoss forward
# -----------------------------------------------------------------------------
def ddn_loss(depth_logits, depth_maps, gt_boxes2d, *,
             weight, alpha, gamma, disc_cfg, fg_weight, bg_weight,
             downsample_factor, tile_hw=2048):
    del downsample_factor  # Balancer in the reference hardcodes downsample_factor=4
    B, C, H, W = depth_logits.shape
    num_bins = int(disc_cfg["num_bins"])
    assert C == num_bins + 1
    HW = H * W

    # Channel-major, lane-dense layout: free reshape of the native NCHW tensor.
    # Kernel upcasts per-tile, so bf16 logits from the FFN are accepted as-is
    # (halves the dominant HBM stream on v5e/v6e).
    logits = depth_logits.reshape(B, C, HW)
    depth = depth_maps.reshape(B, 1, HW).astype(jnp.float32)

    # 2D boxes -> integer (u1,v1,u2,v2) bounds at feature-map scale; scalar-
    # prefetched into SMEM (fg rasterized in-kernel: no concat, no fg HBM stream).
    N = int(gt_boxes2d.shape[1])
    if N == 0:
        gt_boxes2d = jnp.zeros((B, 1, 4), dtype=jnp.float32)
        N = 1
    boxes = jnp.asarray(gt_boxes2d, jnp.float32) / 4.0
    boxes_i32 = jnp.stack([jnp.floor(boxes[..., 0]), jnp.floor(boxes[..., 1]),
                           jnp.ceil(boxes[..., 2]), jnp.ceil(boxes[..., 3])],
                          axis=-1).astype(jnp.int32).reshape(-1)        # (B*N*4,)

    # Balanced tiles (avoid a mostly-masked last tile); tile=2048 default fits
    # v5e's 16 MiB / v7x's 32 MiB scoped VMEM even at production C=81.
    # NB: don't tune tile on tiny test C — sweep with the real num_bins.
    tile_hw = max(128, int(tile_hw))
    n_req = pl.cdiv(HW, tile_hw)
    tile = min(_round_up(pl.cdiv(HW, n_req), 128), _round_up(HW, 128))
    n_tiles = pl.cdiv(HW, tile)

    kernel = functools.partial(
        _ddn_loss_kernel,
        mode=disc_cfg["mode"], gamma=float(gamma),
        depth_min=float(disc_cfg["depth_min"]),
        depth_max=float(disc_cfg["depth_max"]),
        num_bins=num_bins, num_boxes=N, width=W, hw=HW, tile=tile)

    # TODO(synk): if xprof shows exposed DMA on v5e, add pipeline_mode=pl.Buffered(3)
    # to the logits BlockSpec; on v6e/v7x the (1-p)^2 / one_hot chain could run bf16.
    parts = pl.pallas_call(
        kernel,
        out_shape=jax.ShapeDtypeStruct((B, n_tiles, 8, 128), jnp.float32),
        grid_spec=pltpu.PrefetchScalarGridSpec(
            num_scalar_prefetch=1,
            grid=(B, n_tiles),
            in_specs=[pl.BlockSpec((None, C, tile), lambda b, i, boxes: (b, 0, i)),
                      pl.BlockSpec((None, 1, tile), lambda b, i, boxes: (b, 0, i))],
            out_specs=pl.BlockSpec((None, 1, 8, 128),
                                   lambda b, i, boxes: (b, i, 0, 0))),
        compiler_params=pltpu.CompilerParams(
            dimension_semantics=("parallel", "parallel")),
    )(boxes_i32, logits, depth)

    fg_sum = jnp.sum(parts[:, :, 0, 0])
    bg_sum = jnp.sum(parts[:, :, 0, 1])
    num_pixels = jnp.float32(B * HW)   # fg_mask.sum() + bg_mask.sum() == B*H*W
    fg_loss = float(alpha) * float(fg_weight) * fg_sum / num_pixels
    bg_loss = float(alpha) * float(bg_weight) * bg_sum / num_pixels
    balancer_loss = fg_loss + bg_loss
    loss = balancer_loss * weight
    # TODO(synk): PyTorch tb_dict stores python floats via .item(); here they stay device scalars.
    tb_dict = {"balancer_loss": balancer_loss, "fg_loss": fg_loss,
               "bg_loss": bg_loss, "ddn_loss": loss}
    return loss, tb_dict


# -----------------------------------------------------------------------------
# Pure-JAX reference (for correctness check)
# -----------------------------------------------------------------------------
def _bin_depths_ref(depth_map, mode, depth_min, depth_max, num_bins):
    if mode == "UD":
        bin_size = (depth_max - depth_min) / num_bins
        idx = (depth_map - depth_min) / bin_size
    elif mode == "LID":
        bin_size = 2.0 * (depth_max - depth_min) / (num_bins * (1.0 + num_bins))
        idx = -0.5 + 0.5 * jnp.sqrt(1.0 + 8.0 * (depth_map - depth_min) / bin_size)
    elif mode == "SID":
        idx = num_bins * (jnp.log(1.0 + depth_map) - math.log(1.0 + depth_min)) / (
            math.log(1.0 + depth_max) - math.log(1.0 + depth_min))
    else:
        raise NotImplementedError(mode)
    invalid = (idx < 0) | (idx > num_bins) | (~jnp.isfinite(idx))
    return jnp.where(invalid, num_bins, jnp.floor(idx)).astype(jnp.int32)


def ddn_loss_ref(depth_logits, depth_maps, gt_boxes2d, *,
                 weight, alpha, gamma, disc_cfg, fg_weight, bg_weight):
    B, C, H, W = depth_logits.shape
    target = _bin_depths_ref(depth_maps, disc_cfg["mode"],
                             disc_cfg["depth_min"], disc_cfg["depth_max"],
                             disc_cfg["num_bins"])
    p = jax.nn.softmax(depth_logits, axis=1) + 1e-8
    focal = -alpha * jnp.power(1.0 - p, gamma) * jnp.log(p)
    one_hot = (jnp.arange(C)[None, :, None, None] == target[:, None, :, :]
               ).astype(jnp.float32) + 1e-6
    loss_px = jnp.sum(one_hot * focal, axis=1)                     # (B, H, W)
    fg = compute_fg_mask(gt_boxes2d, (B, H, W), 4).astype(jnp.float32)
    bg = 1.0 - fg
    num_pixels = float(B * H * W)
    lw = loss_px * (fg_weight * fg + bg_weight * bg)
    fg_loss = jnp.sum(lw * fg) / num_pixels
    bg_loss = jnp.sum(lw * bg) / num_pixels
    return (fg_loss + bg_loss) * weight


if __name__ == "__main__":
    key = jax.random.PRNGKey(0)
    B, H, W = 2, 16, 16
    num_bins = 8
    N_boxes = 3
    cfg = dict(weight=3.0, alpha=0.25, gamma=2.0,
               disc_cfg={"mode": "LID", "num_bins": num_bins,
                         "depth_min": 2.0, "depth_max": 46.8},
               fg_weight=13.0, bg_weight=1.0)

    k1, k2, k3 = jax.random.split(key, 3)
    depth_logits = jax.random.normal(k1, (B, num_bins + 1, H, W), dtype=jnp.float32)
    depth_maps = jax.random.uniform(k2, (B, H, W), minval=0.0, maxval=50.0,
                                    dtype=jnp.float32)
    # 2D boxes (u1, v1, u2, v2) in full-resolution image coords (image = 4*H x 4*W).
    img_h, img_w = H * 4, W * 4
    kb1, kb2, kb3, kb4 = jax.random.split(k3, 4)
    u1 = jax.random.uniform(kb1, (B, N_boxes), minval=0.0, maxval=img_w / 2)
    v1 = jax.random.uniform(kb2, (B, N_boxes), minval=0.0, maxval=img_h / 2)
    du = jax.random.uniform(kb3, (B, N_boxes), minval=4.0, maxval=img_w / 2)
    dv = jax.random.uniform(kb4, (B, N_boxes), minval=4.0, maxval=img_h / 2)
    gt_boxes2d = jnp.stack([u1, v1, jnp.minimum(u1 + du, img_w),
                            jnp.minimum(v1 + dv, img_h)], axis=-1)

    loss, tb_dict = ddn_loss(depth_logits, depth_maps, gt_boxes2d,
                             downsample_factor=4, **cfg)
    loss = jax.block_until_ready(loss)

    ref = jax.block_until_ready(
        ddn_loss_ref(depth_logits, depth_maps, gt_boxes2d, **cfg))

    assert jnp.isfinite(loss), "non-finite loss"
    assert abs(float(loss) - float(ref)) <= 1e-3 * (abs(float(ref)) + 1e-4), \
        f"mismatch: pallas={float(loss)} ref={float(ref)}"
    print("KERNEL_OK")
</pallas_src>

<mosaic_0001>
module attributes {stable_mosaic.version = 11 : i64} {
  func.func @_ddn_loss_kernel(%arg0: i32, %arg1: i32, %arg2: memref<24xi32, #tpu.memory_space<smem>>, %arg3: memref<1x9x256xf32, #tpu.memory_space<vmem>>, %arg4: memref<1x1x256xf32, #tpu.memory_space<vmem>>, %arg5: memref<1x1x8x128xf32, #tpu.memory_space<vmem>>) attributes {dimension_semantics = [#tpu.dimension_semantics<parallel>, #tpu.dimension_semantics<parallel>], iteration_bounds = array<i64: 2, 1>, scalar_prefetch = 1 : i64, scratch_operands = 0 : i64, tpu.core_type = #tpu.core_type<tc>, window_params = [{transform_indices = @transform_0, window_bounds = array<i64: 1, 9, 256>}, {transform_indices = @transform_1, window_bounds = array<i64: 1, 1, 256>}, {transform_indices = @transform_2, window_bounds = array<i64: 1, 1, 8, 128>}]} {
    %c0 = arith.constant 0 : index
    %c0_0 = arith.constant 0 : index
    %c0_1 = arith.constant 0 : index
    %0 = vector.load %arg3[%c0, %c0_0, %c0_1] : memref<1x9x256xf32, #tpu.memory_space<vmem>>, vector<1x9x256xf32>
    %1 = vector.shape_cast %0 : vector<1x9x256xf32> to vector<9x256xf32>
    %c0_2 = arith.constant 0 : index
    %c0_3 = arith.constant 0 : index
    %c0_4 = arith.constant 0 : index
    %2 = vector.load %arg4[%c0_2, %c0_3, %c0_4] : memref<1x1x256xf32, #tpu.memory_space<vmem>>, vector<1x1x256xf32>
    %3 = vector.shape_cast %2 : vector<1x1x256xf32> to vector<1x256xf32>
    %4 = tpu.iota {dimensions = array<i32: 1>} : vector<1x256xi32>
    %c256_i32 = arith.constant 256 : i32
    %5 = arith.muli %arg1, %c256_i32 : i32
    %6 = vector.broadcast %5 : i32 to vector<1x256xi32>
    %7 = arith.addi %6, %4 : vector<1x256xi32>
    %c256_i32_5 = arith.constant 256 : i32
    %8 = vector.broadcast %c256_i32_5 : i32 to vector<1x256xi32>
    %9 = arith.cmpi slt, %7, %8 : vector<1x256xi32>
    %10 = arith.sitofp %7 : vector<1x256xi32> to vector<1x256xf32>
    %cst = arith.constant 5.000000e-01 : f32
    %11 = vector.broadcast %cst : f32 to vector<1x256xf32>
    %12 = arith.addf %10, %11 : vector<1x256xf32>
    %cst_6 = arith.constant 1.600000e+01 : f32
    %13 = vector.broadcast %cst_6 : f32 to vector<1x256xf32>
    %14 = arith.divf %12, %13 : vector<1x256xf32>
    %15 = math.floor %14 : vector<1x256xf32>
    %cst_7 = arith.constant 1.600000e+01 : f32
    %16 = vector.broadcast %cst_7 : f32 to vector<1x256xf32>
    %17 = arith.mulf %15, %16 : vector<1x256xf32>
    %18 = arith.subf %10, %17 : vector<1x256xf32>
    %false = arith.constant false
    %19 = vector.broadcast %false : i1 to vector<1x256xi1>
    %c12_i32 = arith.constant 12 : i32
    %20 = arith.muli %arg0, %c12_i32 : i32
    %c0_i32 = arith.constant 0 : i32
    %21 = arith.addi %20, %c0_i32 : i32
    %c0_i32_8 = arith.constant 0 : i32
    %22 = arith.addi %21, %c0_i32_8 : i32
    %23 = arith.index_cast %22 : i32 to index
    %24 = memref.load %arg2[%23] : memref<24xi32, #tpu.memory_space<smem>>
    %25 = arith.sitofp %24 : i32 to f32
    %c1_i32 = arith.constant 1 : i32
    %26 = arith.addi %21, %c1_i32 : i32
    %27 = arith.index_cast %26 : i32 to index
    %28 = memref.load %arg2[%27] : memref<24xi32, #tpu.memory_space<smem>>
    %29 = arith.sitofp %28 : i32 to f32
    %c2_i32 = arith.constant 2 : i32
    %30 = arith.addi %21, %c2_i32 : i32
    %31 = arith.index_cast %30 : i32 to index
    %32 = memref.load %arg2[%31] : memref<24xi32, #tpu.memory_space<smem>>
    %33 = arith.sitofp %32 : i32 to f32
    %c3_i32 = arith.constant 3 : i32
    %34 = arith.addi %21, %c3_i32 : i32
    %35 = arith.index_cast %34 : i32 to index
    %36 = memref.load %arg2[%35] : memref<24xi32, #tpu.memory_space<smem>>
    %37 = arith.sitofp %36 : i32 to f32
    %38 = vector.broadcast %25 : f32 to vector<1x256xf32>
    %39 = arith.cmpf oge, %18, %38 : vector<1x256xf32>
    %40 = vector.broadcast %33 : f32 to vector<1x256xf32>
    %41 = arith.cmpf olt, %18, %40 : vector<1x256xf32>
    %42 = arith.andi %39, %41 : vector<1x256xi1>
    %43 = vector.broadcast %29 : f32 to vector<1x256xf32>
    %44 = arith.cmpf oge, %15, %43 : vector<1x256xf32>
    %45 = arith.andi %42, %44 : vector<1x256xi1>
    %46 = vector.broadcast %37 : f32 to vector<1x256xf32>
    %47 = arith.cmpf olt, %15, %46 : vector<1x256xf32>
    %48 = arith.andi %45, %47 : vector<1x256xi1>
    %49 = arith.ori %19, %48 : vector<1x256xi1>
    %c4_i32 = arith.constant 4 : i32
    %50 = arith.addi %20, %c4_i32 : i32
    %c0_i32_9 = arith.constant 0 : i32
    %51 = arith.addi %50, %c0_i32_9 : i32
    %52 = arith.index_cast %51 : i32 to index
    %53 = memref.load %arg2[%52] : memref<24xi32, #tpu.memory_space<smem>>
    %54 = arith.sitofp %53 : i32 to f32
    %c1_i32_10 = arith.constant 1 : i32
    %55 = arith.addi %50, %c1_i32_10 : i32
    %56 = arith.index_cast %55 : i32 to index
    %57 = memref.load %arg2[%56] : memref<24xi32, #tpu.memory_space<smem>>
    %58 = arith.sitofp %57 : i32 to f32
    %c2_i32_11 = arith.constant 2 : i32
    %59 = arith.addi %50, %c2_i32_11 : i32
    %60 = arith.index_cast %59 : i32 to index
    %61 = memref.load %arg2[%60] : memref<24xi32, #tpu.memory_space<smem>>
    %62 = arith.sitofp %61 : i32 to f32
    %c3_i32_12 = arith.constant 3 : i32
    %63 = arith.addi %50, %c3_i32_12 : i32
    %64 = arith.index_cast %63 : i32 to index
    %65 = memref.load %arg2[%64] : memref<24xi32, #tpu.memory_space<smem>>
    %66 = arith.sitofp %65 : i32 to f32
    %67 = vector.broadcast %54 : f32 to vector<1x256xf32>
    %68 = arith.cmpf oge, %18, %67 : vector<1x256xf32>
    %69 = vector.broadcast %62 : f32 to vector<1x256xf32>
    %70 = arith.cmpf olt, %18, %69 : vector<1x256xf32>
    %71 = arith.andi %68, %70 : vector<1x256xi1>
    %72 = vector.broadcast %58 : f32 to vector<1x256xf32>
    %73 = arith.cmpf oge, %15, %72 : vector<1x256xf32>
    %74 = arith.andi %71, %73 : vector<1x256xi1>
    %75 = vector.broadcast %66 : f32 to vector<1x256xf32>
    %76 = arith.cmpf olt, %15, %75 : vector<1x256xf32>
    %77 = arith.andi %74, %76 : vector<1x256xi1>
    %78 = arith.ori %49, %77 : vector<1x256xi1>
    %c8_i32 = arith.constant 8 : i32
    %79 = arith.addi %20, %c8_i32 : i32
    %c0_i32_13 = arith.constant 0 : i32
    %80 = arith.addi %79, %c0_i32_13 : i32
    %81 = arith.index_cast %80 : i32 to index
    %82 = memref.load %arg2[%81] : memref<24xi32, #tpu.memory_space<smem>>
    %83 = arith.sitofp %82 : i32 to f32
    %c1_i32_14 = arith.constant 1 : i32
    %84 = arith.addi %79, %c1_i32_14 : i32
    %85 = arith.index_cast %84 : i32 to index
    %86 = memref.load %arg2[%85] : memref<24xi32, #tpu.memory_space<smem>>
    %87 = arith.sitofp %86 : i32 to f32
    %c2_i32_15 = arith.constant 2 : i32
    %88 = arith.addi %79, %c2_i32_15 : i32
    %89 = arith.index_cast %88 : i32 to index
    %90 = memref.load %arg2[%89] : memref<24xi32, #tpu.memory_space<smem>>
    %91 = arith.sitofp %90 : i32 to f32
    %c3_i32_16 = arith.constant 3 : i32
    %92 = arith.addi %79, %c3_i32_16 : i32
    %93 = arith.index_cast %92 : i32 to index
    %94 = memref.load %arg2[%93] : memref<24xi32, #tpu.memory_space<smem>>
    %95 = arith.sitofp %94 : i32 to f32
    %96 = vector.broadcast %83 : f32 to vector<1x256xf32>
    %97 = arith.cmpf oge, %18, %96 : vector<1x256xf32>
    %98 = vector.broadcast %91 : f32 to vector<1x256xf32>
    %99 = arith.cmpf olt, %18, %98 : vector<1x256xf32>
    %100 = arith.andi %97, %99 : vector<1x256xi1>
    %101 = vector.broadcast %87 : f32 to vector<1x256xf32>
    %102 = arith.cmpf oge, %15, %101 : vector<1x256xf32>
    %103 = arith.andi %100, %102 : vector<1x256xi1>
    %104 = vector.broadcast %95 : f32 to vector<1x256xf32>
    %105 = arith.cmpf olt, %15, %104 : vector<1x256xf32>
    %106 = arith.andi %103, %105 : vector<1x256xi1>
    %107 = arith.ori %78, %106 : vector<1x256xi1>
    %cst_17 = arith.constant 2.000000e+00 : f32
    %108 = vector.broadcast %cst_17 : f32 to vector<1x256xf32>
    %109 = arith.subf %3, %108 : vector<1x256xf32>
    %cst_18 = arith.constant 8.000000e+00 : f32
    %110 = vector.broadcast %cst_18 : f32 to vector<1x256xf32>
    %111 = arith.mulf %110, %109 : vector<1x256xf32>
    %cst_19 = arith.constant 1.24444449 : f32
    %112 = vector.broadcast %cst_19 : f32 to vector<1x256xf32>
    %113 = arith.divf %111, %112 : vector<1x256xf32>
    %cst_20 = arith.constant 1.000000e+00 : f32
    %114 = vector.broadcast %cst_20 : f32 to vector<1x256xf32>
    %115 = arith.addf %114, %113 : vector<1x256xf32>
    %116 = math.sqrt %115 : vector<1x256xf32>
    %cst_21 = arith.constant 5.000000e-01 : f32
    %117 = vector.broadcast %cst_21 : f32 to vector<1x256xf32>
    %118 = arith.mulf %117, %116 : vector<1x256xf32>
    %cst_22 = arith.constant -5.000000e-01 : f32
    %119 = vector.broadcast %cst_22 : f32 to vector<1x256xf32>
    %120 = arith.addf %119, %118 : vector<1x256xf32>
    %cst_23 = arith.constant 0.000000e+00 : f32
    %121 = vector.broadcast %cst_23 : f32 to vector<1x256xf32>
    %122 = arith.cmpf olt, %120, %121 : vector<1x256xf32>
    %cst_24 = arith.constant 8.000000e+00 : f32
    %123 = vector.broadcast %cst_24 : f32 to vector<1x256xf32>
    %124 = arith.cmpf ogt, %120, %123 : vector<1x256xf32>
    %125 = arith.ori %122, %124 : vector<1x256xi1>
    %126 = tpu.weird %120 : vector<1x256xf32> -> vector<1x256xi1>
    %cst_25 = arith.constant dense<true> : vector<1x256xi1>
    %127 = arith.xori %126, %cst_25 : vector<1x256xi1>
    %cst_26 = arith.constant dense<true> : vector<1x256xi1>
    %128 = arith.xori %127, %cst_26 : vector<1x256xi1>
    %129 = arith.ori %125, %128 : vector<1x256xi1>
    %130 = math.floor %120 : vector<1x256xf32>
    %cst_27 = arith.constant 8.000000e+00 : f32
    %131 = vector.broadcast %cst_27 : f32 to vector<1x256xf32>
    %132 = arith.select %129, %131, %130 : vector<1x256xi1>, vector<1x256xf32>
    %133 = arith.fptosi %132 : vector<1x256xf32> to vector<1x256xi32>
    %cst_28 = arith.constant dense<0xFF800000> : vector<256xf32>
    %134 = vector.multi_reduction <maximumf>, %1, %cst_28 [0] : vector<9x256xf32> to vector<256xf32>
    %135 = vector.shape_cast %134 : vector<256xf32> to vector<1x256xf32>
    %136 = vector.broadcast %135 : vector<1x256xf32> to vector<9x256xf32>
    %137 = arith.subf %1, %136 : vector<9x256xf32>
    %138 = math.exp %137 : vector<9x256xf32>
    %cst_29 = arith.constant dense<0.000000e+00> : vector<256xf32>
    %139 = vector.multi_reduction <add>, %138, %cst_29 [0] : vector<9x256xf32> to vector<256xf32>
    %140 = vector.shape_cast %139 : vector<256xf32> to vector<1x256xf32>
    %141 = tpu.reciprocal %140 {approx = true} : vector<1x256xf32> -> vector<1x256xf32>
    %142 = vector.broadcast %141 : vector<1x256xf32> to vector<9x256xf32>
    %143 = arith.mulf %138, %142 : vector<9x256xf32>
    %144 = math.log %140 : vector<1x256xf32>
    %145 = vector.broadcast %144 : vector<1x256xf32> to vector<9x256xf32>
    %146 = arith.subf %137, %145 : vector<9x256xf32>
    %cst_30 = arith.constant 1.000000e+00 : f32
    %147 = vector.broadcast %cst_30 : f32 to vector<9x256xf32>
    %148 = arith.subf %147, %143 : vector<9x256xf32>
    %149 = arith.mulf %148, %148 : vector<9x256xf32>
    %150 = arith.mulf %149, %146 : vector<9x256xf32>
    %cst_31 = arith.constant 0.000000e+00 : f32
    %151 = vector.broadcast %cst_31 : f32 to vector<9x256xf32>
    %152 = arith.subf %151, %150 : vector<9x256xf32>
    %153 = tpu.iota {dimensions = array<i32: 0>} : vector<9x256xi32>
    %154 = vector.broadcast %133 : vector<1x256xi32> to vector<9x256xi32>
    %155 = arith.cmpi eq, %153, %154 : vector<9x256xi32>
    %156 = arith.extui %155 : vector<9x256xi1> to vector<9x256xi32>
    %157 = arith.sitofp %156 : vector<9x256xi32> to vector<9x256xf32>
    %cst_32 = arith.constant 9.99999997E-7 : f32
    %158 = vector.broadcast %cst_32 : f32 to vector<9x256xf32>
    %159 = arith.addf %157, %158 : vector<9x256xf32>
    %160 = arith.mulf %159, %152 : vector<9x256xf32>
    %cst_33 = arith.constant dense<0.000000e+00> : vector<256xf32>
    %161 = vector.multi_reduction <add>, %160, %cst_33 [0] : vector<9x256xf32> to vector<256xf32>
    %162 = vector.shape_cast %161 : vector<256xf32> to vector<1x256xf32>
    %cst_34 = arith.constant 0.000000e+00 : f32
    %163 = vector.broadcast %cst_34 : f32 to vector<1x256xf32>
    %164 = arith.select %9, %162, %163 : vector<1x256xi1>, vector<1x256xf32>
    %165 = arith.andi %9, %107 : vector<1x256xi1>
    %166 = arith.extui %165 : vector<1x256xi1> to vector<1x256xi32>
    %167 = arith.sitofp %166 : vector<1x256xi32> to vector<1x256xf32>
    %cst_35 = arith.constant dense<true> : vector<1x256xi1>
    %168 = arith.xori %107, %cst_35 : vector<1x256xi1>
    %169 = arith.andi %9, %168 : vector<1x256xi1>
    %170 = arith.extui %169 : vector<1x256xi1> to vector<1x256xi32>
    %171 = arith.sitofp %170 : vector<1x256xi32> to vector<1x256xf32>
    %172 = arith.mulf %164, %167 : vector<1x256xf32>
    %cst_36 = arith.constant dense<0.000000e+00> : vector<1xf32>
    %173 = vector.multi_reduction <add>, %172, %cst_36 [1] : vector<1x256xf32> to vector<1xf32>
    %174 = vector.shape_cast %173 : vector<1xf32> to vector<1x1xf32>
    %175 = arith.mulf %164, %171 : vector<1x256xf32>
    %cst_37 = arith.constant dense<0.000000e+00> : vector<1xf32>
    %176 = vector.multi_reduction <add>, %175, %cst_37 [1] : vector<1x256xf32> to vector<1xf32>
    %177 = vector.shape_cast %176 : vector<1xf32> to vector<1x1xf32>
    %178 = tpu.iota {dimensions = array<i32: 0>} : vector<8x128xi32>
    %179 = tpu.iota {dimensions = array<i32: 1>} : vector<8x128xi32>
    %c0_i32_38 = arith.constant 0 : i32
    %180 = vector.broadcast %c0_i32_38 : i32 to vector<8x128xi32>
    %181 = arith.cmpi eq, %178, %180 : vector<8x128xi32>
    %c0_i32_39 = arith.constant 0 : i32
    %182 = vector.broadcast %c0_i32_39 : i32 to vector<8x128xi32>
    %183 = arith.cmpi eq, %179, %182 : vector<8x128xi32>
    %184 = arith.andi %181, %183 : vector<8x128xi1>
    %cst_40 = arith.constant 0.000000e+00 : f32
    %185 = vector.shape_cast %174 : vector<1x1xf32> to vector<1x1xf32>
    %186 = vector.broadcast %185 : vector<1x1xf32> to vector<8x128xf32>
    %187 = vector.broadcast %cst_40 : f32 to vector<8x128xf32>
    %188 = arith.select %184, %186, %187 : vector<8x128xi1>, vector<8x128xf32>
    %c0_i32_41 = arith.constant 0 : i32
    %189 = vector.broadcast %c0_i32_41 : i32 to vector<8x128xi32>
    %190 = arith.cmpi eq, %178, %189 : vector<8x128xi32>
    %c1_i32_42 = arith.constant 1 : i32
    %191 = vector.broadcast %c1_i32_42 : i32 to vector<8x128xi32>
    %192 = arith.cmpi eq, %179, %191 : vector<8x128xi32>
    %193 = arith.andi %190, %192 : vector<8x128xi1>
    %cst_43 = arith.constant 0.000000e+00 : f32
    %194 = vector.shape_cast %177 : vector<1x1xf32> to vector<1x1xf32>
    %195 = vector.broadcast %194 : vector<1x1xf32> to vector<8x128xf32>
    %196 = vector.broadcast %cst_43 : f32 to vector<8x128xf32>
    %197 = arith.select %193, %195, %196 : vector<8x128xi1>, vector<8x128xf32>
    %198 = arith.addf %188, %197 : vector<8x128xf32>
    %c0_44 = arith.constant 0 : index
    %c0_45 = arith.constant 0 : index
    %c0_46 = arith.constant 0 : index
    %c0_47 = arith.constant 0 : index
    %199 = vector.load %arg5[%c0_44, %c0_45, %c0_46, %c0_47] : memref<1x1x8x128xf32, #tpu.memory_space<vmem>>, vector<1x1x8x128xf32>
    %200 = vector.shape_cast %199 : vector<1x1x8x128xf32> to vector<8x128xf32>
    %201 = vector.shape_cast %198 : vector<8x128xf32> to vector<1x1x8x128xf32>
    tpu.vector_store %arg5[%c0_44, %c0_45, %c0_46, %c0_47], %201 {strides = array<i32>} : memref<1x1x8x128xf32, #tpu.memory_space<vmem>>, vector<1x1x8x128xf32>,
    return
  }
  func.func @transform_0(%arg0: i32, %arg1: i32, %arg2: memref<24xi32, #tpu.memory_space<smem>>) -> (i32, i32, i32) {
    %c0_i32 = arith.constant 0 : i32
    %c0_i32_0 = arith.constant 0 : i32
    return %arg0, %c0_i32, %arg1 : i32, i32, i32
  }
  func.func @transform_1(%arg0: i32, %arg1: i32, %arg2: memref<24xi32, #tpu.memory_space<smem>>) -> (i32, i32, i32) {
    %c0_i32 = arith.constant 0 : i32
    %c0_i32_0 = arith.constant 0 : i32
    return %arg0, %c0_i32, %arg1 : i32, i32, i32
  }
  func.func @transform_2(%arg0: i32, %arg1: i32, %arg2: memref<24xi32, #tpu.memory_space<smem>>) -> (i32, i32, i32, i32) {
    %c0_i32 = arith.constant 0 : i32
    %c0_i32_0 = arith.constant 0 : i32
    %c0_i32_1 = arith.constant 0 : i32
    return %arg0, %arg1, %c0_i32, %c0_i32_0 : i32, i32, i32, i32
  }
}

</mosaic_0001>

<llo_original>
// kernel: tpu_custom_call.1
$region0: #{tpu_custom_call.1}
  #allocation0 [shape = 'u32[]', space=smem, size = 0x4, offset = 0x4, fixed_abs, tag = 'smem constant byte address 0x4 - core index']
  #allocation1 [shape = 'u32[72,128]{1,0:T(1,128)}', space=vmem, size = 0x9000, scoped, tag = 'internal scratch']
  #allocation2 [shape = 's32[1]{0}', space=sflag, size = 0x4, scoped, tag = 'scoped memory for tpu_custom_call.1']
  #allocation3 [shape = 'u8[512]{0}', space=smem, size = 0x200, scoped, tag = 'prefetched SMEM operand 0']
  %s0 = inlined_call_operand.vmem [shape: s32[24], index: 0, kind: input, shape index: {}]
  %s1 = inlined_call_operand.vmem [shape: f32[2,9,256], index: 1, kind: input, shape index: {}]
  %s2 = inlined_call_operand.vmem [shape: f32[2,1,256], index: 2, kind: input, shape index: {}]
  %s3 = inlined_call_operand.hbm [shape: f32[2,1,8,128], index: 3, kind: output, shape index: {}]
  %s4 = sld [smem:[#allocation0]]
  $region41: #{tpu_custom_call.1} parent=0
    _
  %s6 = ssub.s32 1, %s4
  %s7 = scalar_select 0, %s6, %s4
  %s9 = sshll.u32 %s0, 4
  %s10 = int_to_ptr.vmem [resolvable:$true] %s9
  %12 = dma.vmem_to_smem %s10, 16, [#allocation3], [#allocation2]
  %14 = dma.done [#allocation2], 16
  %15 = sfence
  $region1: #{tpu_custom_call.1} parent=0
    #allocation4 [shape = 'u8[8192]{0}', space=vmem, size = 0x2000, scoped, tag = 'output window, operand 0']
    #allocation5 [shape = 's32[2]{0}', space=sflag, size = 0x8, scoped, tag = 'scoped memory for tpu_custom_call.1']
    %16 = vsyncpa [#allocation5], 0
    %s17 = scalar_lea.sflag [#allocation5], 1
    %18 = vsyncpa %s17, 0
    loop: start=0, step=1, limit=4
    $region2: #{tpu_custom_call.1} parent=1 // loop_pre_header
      _
    $region3: #{tpu_custom_call.1} parent=1 // loop_header
      %s20 = sphi 0, %s24
      %p21 = scmp.ge.s32.totalorder %s20, 4
      %s27 = sphi 0, %s39
      %s28 = sphi 0, %s35
      %s29 = sphi 0, %s27
      %s30 = sphi 0, %s28
      %s31 = sphi 0, %s29
      %s32 = sphi 0, %s30
      %s44 = sphi 0, %s46
      %s47 = sphi 0, %s44
      %s48 = sphi 0, %s47
      %s64 = sphi 0, %s48
      %s72 = sphi 0, %s74
      %s75 = sphi 0, %s72
      %s76 = sphi 0, %s75
      %s92 = sphi 0, %s76
      %s100 = sphi 0, %s102
      %s103 = sphi 0, %s100
      %s104 = sphi 0, %s103
      %s120 = sphi 0, %s104
    $region4: #{tpu_custom_call.1} parent=1 // loop_header_branch
      %23 = sbr.rel (%p21) target = $region8
    $region5: #{tpu_custom_call.1} parent=1 // loop_body
      %s25 = ssub.s32 %s20, 1
      %s26 = ssub.s32 %s20, 2
      %s33 = sadd.s32 1, %s28
      %p34 = scmp.ge.s32.totalorder %s33, 1
      %s35 = scalar_select %p34, 0, %s33
      %s36 = sadd.s32 1, %s27
      %s37 = scalar_select %p34, %s36, %s27
      %p38 = scmp.ge.s32.totalorder %s37, 2
      %s39 = scalar_select %p38, 0, %s37
      %s40 = ssub.s32 %s27, %s39
      %s41 = ssub.s32 %s28, %s35
      %s42 = sor.u32 %s40, %s41
      %p43 = scmp.eq.s32.totalorder %s42, 0
      %s45 = sadd.s32 %s44, 1
      %s46 = scalar_select %p43, %s44, %s45
      %p49 = pneg %p43
      %p50 = scmp.eq.s32.totalorder %s20, 1
      %p51 = por %p49, %p50
      %p52 = scmp.ne.s32.totalorder %s44, %s47
      %p53 = scmp.eq.s32.totalorder %s20, 0
      %p54 = por %p52, %p53
      %p55 = scmp.ne.s32.totalorder %s44, %s47
      %p56 = scmp.eq.s32.totalorder %s25, 1
      %p57 = por %p55, %p56
      %p58 = scmp.ne.s32.totalorder %s47, %s48
      %p59 = scmp.eq.s32.totalorder %s25, 0
      %p60 = por %p58, %p59
      %p61 = scmp.ne.s32.totalorder %s47, %s48
      %p62 = scmp.eq.s32.totalorder %s26, 1
      %p63 = por %p61, %p62
      %p65 = scmp.ne.s32.totalorder %s48, %s64
      %p66 = scmp.eq.s32.totalorder %s26, 0
      %p67 = por %p65, %p66
      %s68 = ssub.s32 %s27, %s39
      %s69 = ssub.s32 %s28, %s35
      %s70 = sor.u32 %s68, %s69
      %p71 = scmp.eq.s32.totalorder %s70, 0
      %s73 = sadd.s32 %s72, 1
      %s74 = scalar_select %p71, %s72, %s73
      %p77 = pneg %p71
      %p78 = scmp.eq.s32.totalorder %s20, 1
      %p79 = por %p77, %p78
      %p80 = scmp.ne.s32.totalorder %s72, %s75
      %p81 = scmp.eq.s32.totalorder %s20, 0
      %p82 = por %p80, %p81
      %p83 = scmp.ne.s32.totalorder %s72, %s75
      %p84 = scmp.eq.s32.totalorder %s25, 1
      %p85 = por %p83, %p84
      %p86 = scmp.ne.s32.totalorder %s75, %s76
      %p87 = scmp.eq.s32.totalorder %s25, 0
      %p88 = por %p86, %p87
      %p89 = scmp.ne.s32.totalorder %s75, %s76
      %p90 = scmp.eq.s32.totalorder %s26, 1
      %p91 = por %p89, %p90
      %p93 = scmp.ne.s32.totalorder %s76, %s92
      %p94 = scmp.eq.s32.totalorder %s26, 0
      %p95 = por %p93, %p94
      %s96 = ssub.s32 %s27, %s39
      %s97 = ssub.s32 %s28, %s35
      %s98 = sor.u32 %s96, %s97
      %p99 = scmp.eq.s32.totalorder %s98, 0
      %s101 = sadd.s32 %s100, 1
      %s102 = scalar_select %p99, %s100, %s101
      %p105 = pneg %p99
      %p106 = scmp.eq.s32.totalorder %s20, 1
      %p107 = por %p105, %p106
      %p108 = scmp.ne.s32.totalorder %s100, %s103
      %p109 = scmp.eq.s32.totalorder %s20, 0
      %p110 = por %p108, %p109
      %p111 = scmp.ne.s32.totalorder %s100, %s103
      %p112 = scmp.eq.s32.totalorder %s25, 1
      %p113 = por %p111, %p112
      %p114 = scmp.ne.s32.totalorder %s103, %s104
      %p115 = scmp.eq.s32.totalorder %s25, 0
      %p116 = por %p114, %p115
      %p117 = scmp.ne.s32.totalorder %s103, %s104
      %p118 = scmp.eq.s32.totalorder %s26, 1
      %p119 = por %p117, %p118
      %p121 = scmp.ne.s32.totalorder %s104, %s120
      %p122 = scmp.eq.s32.totalorder %s26, 0
      %p123 = por %p121, %p122
      %p124 = scmp.le.s32.totalorder 1, %s20
      %p125 = scmp.lt.s32.totalorder %s20, 3
      %p126 = pnand %p124, %p125
      %p127 = pneg %p126
      // Predicated region
      $region9: #{tpu_custom_call.1} parent=5 // pred_check
        _
      $region10: #{tpu_custom_call.1} parent=5 // pred_check_branch
        %129 = sbr.rel (%p126) target = $region12
      $region11: #{tpu_custom_call.1} parent=5 // pred_region
        %s130 = ssub.s32 %s20, 1
      $region12: #{tpu_custom_call.1} parent=5 // pred_fallthru
        _
      %p131 = scmp.lt.s32.totalorder %s20, 2
      // Predicated region
      $region13: #{tpu_custom_call.1} parent=5 // pred_check
        %p132 = pneg %p131
      $region14: #{tpu_custom_call.1} parent=5 // pred_check_branch
        %134 = sbr.rel (%p132) target = $region16
      $region15: #{tpu_custom_call.1} parent=5 // pred_region
        // Predicated region
        $region17: #{tpu_custom_call.1} parent=15 // pred_check
          %p135 = pneg %p54
        $region18: #{tpu_custom_call.1} parent=15 // pred_check_branch
          %137 = sbr.rel (%p135) target = $region20
        $region19: #{tpu_custom_call.1} parent=15 // pred_region
          %s138 = smul.u32 2, %s28
          %p139 = scmp.lt.s32.totalorder %s27, 1
          %s140 = scalar_select %p139, %s27, 1
          %p141 = scmp.lt.s32.totalorder %s138, 1
          %s142 = scalar_select %p141, %s138, 1
          %s143 = smul.addr %s140, 4
          %s144 = sadd.s32 %s142, %s143
          %s145 = smul.addr %s144, 8
          %s146 = scalar_lea.vmem %s1, %s145
          %s147 = smul.u32 2, %s28
        $region20: #{tpu_custom_call.1} parent=15 // pred_fallthru
          _
        // Predicated region
        $region21: #{tpu_custom_call.1} parent=15 // pred_check
          %p148 = pneg %p82
        $region22: #{tpu_custom_call.1} parent=15 // pred_check_branch
          %150 = sbr.rel (%p148) target = $region24
        $region23: #{tpu_custom_call.1} parent=15 // pred_region
          %s151 = smul.u32 2, %s28
          %p152 = scmp.lt.s32.totalorder %s27, 1
          %s153 = scalar_select %p152, %s27, 1
          %p154 = scmp.lt.s32.totalorder %s151, 1
          %s155 = scalar_select %p154, %s151, 1
          %s156 = smul.addr %s153, 2
          %s157 = sadd.s32 %s155, %s156
          %s158 = scalar_lea.vmem %s2, %s157
          %s159 = smul.u32 2, %s28
        $region24: #{tpu_custom_call.1} parent=15 // pred_fallthru
          _
      $region16: #{tpu_custom_call.1} parent=5 // pred_fallthru
        _
      %p160 = scmp.le.s32.totalorder 1, %s20
      %p161 = scmp.lt.s32.totalorder %s20, 3
      %p162 = pnand %p160, %p161
      %p163 = pneg %p162
      // Predicated region
      $region25: #{tpu_custom_call.1} parent=5 // pred_check
        _
      $region26: #{tpu_custom_call.1} parent=5 // pred_check_branch
        %165 = sbr.rel (%p162) target = $region28
      $region27: #{tpu_custom_call.1} parent=5 // pred_region
        %s166 = ssub.s32 %s20, 1
        %s167 = smul.u32 2, %s30
        %p168 = scmp.lt.s32.totalorder %s29, 1
        %s169 = scalar_select %p168, %s29, 1
        %p170 = scmp.lt.s32.totalorder %s167, 1
        %s171 = scalar_select %p170, %s167, 1
        %s172 = smul.addr %s169, 4
        %s173 = sadd.s32 %s171, %s172
        %s174 = smul.addr %s173, 8
        %s175 = scalar_lea.vmem %s1, %s174
        %p176 = pneg %p60
        %p177 = pneg %p57
        %s178 = smul.u32 2, %s30
        %p179 = scmp.lt.s32.totalorder %s29, 1
        %s180 = scalar_select %p179, %s29, 1
        %p181 = scmp.lt.s32.totalorder %s178, 1
        %s182 = scalar_select %p181, %s178, 1
        %s183 = smul.addr %s180, 2
        %s184 = sadd.s32 %s182, %s183
        %s185 = scalar_lea.vmem %s2, %s184
        %p186 = pneg %p88
        %p187 = pneg %p85
        %p188 = pneg %p116
        %p189 = pneg %p113
        %s190 = sand.u32 %s103, 1
        %s191 = scalar_lea.sflag [#allocation5], %s190
        %s192 = sand.u32 %s103, 1
        %s193 = smul.addr %s192, 8
        %s194 = scalar_lea.vmem [#allocation4], %s193
        %s195 = smul.u32 2, %s30
        %p196 = scmp.lt.s32.totalorder %s29, 1
        %s197 = scalar_select %p196, %s29, 1
        %p198 = scmp.lt.s32.totalorder %s195, 1
        %s199 = scalar_select %p198, %s195, 1
        %s200 = smul.addr %s197, 4
        %s201 = sadd.s32 %s199, %s200
        %s202 = smul.addr %s201, 8
        %s203 = scalar_lea.vmem %s1, %s202
        %s204 = smul.u32 2, %s30
        %s205 = smul.u32 2, %s30
        %p206 = scmp.lt.s32.totalorder %s29, 1
        %s207 = scalar_select %p206, %s29, 1
        %p208 = scmp.lt.s32.totalorder %s205, 1
        %s209 = scalar_select %p208, %s205, 1
        %s210 = smul.addr %s207, 2
        %s211 = sadd.s32 %s209, %s210
        %s212 = scalar_lea.vmem %s2, %s211
        %s213 = smul.u32 2, %s30
        %v214 = vld [vmem:[%s203] sm:$0xff]
        %v215 = vld [vmem:[%s203 + $0x8] sm:$0xff]
        %v216 = vld [vmem:[%s203 + $0x10] sm:$0x1]
        %v217 = vld [vmem:[%s203 + $0x18] sm:$0x1]
        %v218 = vld [vmem:[%s212] sm:$0x3]
        %v219 = vlaneseq
        %v220 = vand.u32 %v219, 127
        %v221 = vadd.s32 %v220, 128
        %s222 = smul.u32 %s30, 256
        %v223 = vstv %s222
        %v224 = vadd.s32 %v223, %v220
        %v225 = vadd.s32 %v223, %v221
        %vm226 = vcmp.lt.s32.totalorder %v224, 256
        %vm227 = vcmp.lt.s32.totalorder %v225, 256
        %v228 = vcvt.s32.f32 %v224
        %v229 = vcvt.s32.f32 %v225
        %v230 = vadd.f32 %v228, 0.5
        %v231 = vadd.f32 %v229, 0.5
        %v232 = vrcp.pop 16.0
        %v233 = vmul.f32 16.0, %v232
        %v234 = vsub.f32 1.0, %v233
        %v235 = vmul.f32 %v232, %v234
        %v236 = vadd.f32 %v232, %v235
        %vm237 = vweird.f32 %v232
        %v238 = vsel %vm237, %v232, %v236
        %v239 = vmul.f32 %v230, %v238
        %v240 = vmul.f32 %v231, %v238
        %v241 = vfloor.f32 %v239
        %v242 = vfloor.f32 %v240
        %v243 = vmul.f32 %v241, 16.0
        %v244 = vmul.f32 %v242, 16.0
        %v245 = vsub.f32 %v228, %v243
        %v246 = vsub.f32 %v229, %v244
        %s247 = smul.u32 %s29, 12
        %s248 = sld [smem:[#allocation3 + %s247]]
        %s249 = scvt.s32.f32 %s248
        %s250 = sadd.s32 %s247, 1
        %s251 = sld [smem:[#allocation3 + %s250]]
        %s252 = scvt.s32.f32 %s251
        %s253 = sadd.s32 %s247, 2
        %s254 = sld [smem:[#allocation3 + %s253]]
        %s255 = scvt.s32.f32 %s254
        %s256 = sadd.s32 %s247, 3
        %s257 = sld [smem:[#allocation3 + %s256]]
        %s258 = scvt.s32.f32 %s257
        %v259 = vstv %s249
        %vm260 = vcmp.ge.f32.partialorder %v245, %v259
        %vm261 = vcmp.ge.f32.partialorder %v246, %v259
        %v262 = vstv %s255
        %vm263 = vcmp.lt.f32.partialorder %v245, %v262
        %vm264 = vcmp.lt.f32.partialorder %v246, %v262
        %vm265 = vmand %vm260, %vm263
        %vm266 = vmand %vm261, %vm264
        %v267 = vstv %s252
        %vm268 = vcmp.ge.f32.partialorder %v241, %v267
        %vm269 = vcmp.ge.f32.partialorder %v242, %v267
        %vm270 = vmand %vm265, %vm268
        %vm271 = vmand %vm266, %vm269
        %v272 = vstv %s258
        %vm273 = vcmp.lt.f32.partialorder %v241, %v272
        %vm274 = vcmp.lt.f32.partialorder %v242, %v272
        %vm275 = vmand %vm270, %vm273
        %vm276 = vmand %vm271, %vm274
        %s277 = sadd.s32 %s247, 4
        %s278 = sld [smem:[#allocation3 + %s277]]
        %s279 = scvt.s32.f32 %s278
        %s280 = sadd.s32 %s247, 5
        %s281 = sld [smem:[#allocation3 + %s280]]
        %s282 = scvt.s32.f32 %s281
        %s283 = sadd.s32 %s247, 6
        %s284 = sld [smem:[#allocation3 + %s283]]
        %s285 = scvt.s32.f32 %s284
        %s286 = sadd.s32 %s247, 7
        %s287 = sld [smem:[#allocation3 + %s286]]
        %s288 = scvt.s32.f32 %s287
        %v289 = vstv %s279
        %vm290 = vcmp.ge.f32.partialorder %v245, %v289
        %vm291 = vcmp.ge.f32.partialorder %v246, %v289
        %v292 = vstv %s285
        %vm293 = vcmp.lt.f32.partialorder %v245, %v292
        %vm294 = vcmp.lt.f32.partialorder %v246, %v292
        %vm295 = vmand %vm290, %vm293
        %vm296 = vmand %vm291, %vm294
        %v297 = vstv %s282
        %vm298 = vcmp.ge.f32.partialorder %v241, %v297
        %vm299 = vcmp.ge.f32.partialorder %v242, %v297
        %vm300 = vmand %vm295, %vm298
        %vm301 = vmand %vm296, %vm299
        %v302 = vstv %s288
        %vm303 = vcmp.lt.f32.partialorder %v241, %v302
        %vm304 = vcmp.lt.f32.partialorder %v242, %v302
        %vm305 = vmand %vm300, %vm303
        %vm306 = vmand %vm301, %vm304
        %vm307 = vmor %vm275, %vm305
        %vm308 = vmor %vm276, %vm306
        %s309 = sadd.s32 %s247, 8
        %s310 = sld [smem:[#allocation3 + %s309]]
        %s311 = scvt.s32.f32 %s310
        %s312 = sadd.s32 %s247, 9
        %s313 = sld [smem:[#allocation3 + %s312]]
        %s314 = scvt.s32.f32 %s313
        %s315 = sadd.s32 %s247, 10
        %s316 = sld [smem:[#allocation3 + %s315]]
        %s317 = scvt.s32.f32 %s316
        %s318 = sadd.s32 %s247, 11
        %s319 = sld [smem:[#allocation3 + %s318]]
        %s320 = scvt.s32.f32 %s319
        %v321 = vstv %s311
        %vm322 = vcmp.ge.f32.partialorder %v245, %v321
        %vm323 = vcmp.ge.f32.partialorder %v246, %v321
        %v324 = vstv %s317
        %vm325 = vcmp.lt.f32.partialorder %v245, %v324
        %vm326 = vcmp.lt.f32.partialorder %v246, %v324
        %vm327 = vmand %vm322, %vm325
        %vm328 = vmand %vm323, %vm326
        %v329 = vstv %s314
        %vm330 = vcmp.ge.f32.partialorder %v241, %v329
        %vm331 = vcmp.ge.f32.partialorder %v242, %v329
        %vm332 = vmand %vm327, %vm330
        %vm333 = vmand %vm328, %vm331
        %v334 = vstv %s320
        %vm335 = vcmp.lt.f32.partialorder %v241, %v334
        %vm336 = vcmp.lt.f32.partialorder %v242, %v334
        %vm337 = vmand %vm332, %vm335
        %vm338 = vmand %vm333, %vm336
        %vm339 = vmor %vm307, %vm337
        %vm340 = vmor %vm308, %vm338
        %v341 = vsub.f32 %v218, 2.0
        %v342 = vmul.f32 %v341, 8.0
        %v343 = vrcp.pop 1.2444445
        %v344 = vmul.f32 1.2444445, %v343
        %v345 = vsub.f32 1.0, %v344
        %v346 = vmul.f32 %v343, %v345
        %v347 = vadd.f32 %v343, %v346
        %vm348 = vweird.f32 %v343
        %v349 = vsel %vm348, %v343, %v347
        %v350 = vmul.f32 %v342, %v349
        %v351 = vadd.f32 %v350, 1.0
        %v352 = vrsqrt.pop %v351
        %v353 = vmul.f32 %v352, %v351
        %v354 = vmul.f32 %v353, %v352
        %v355 = vmul.f32 0.5, %v354
        %v356 = vsub.f32 1.5, %v355
        %v357 = vmul.f32 %v352, %v356
        %v358 = vmul.f32 %v351, %v357
        %vm359 = vcmp.eq.f32.partialorder %v351, inf
        %v360 = vsel %vm359, %v351, %v358
        %vm361 = vcmp.eq.f32.partialorder %v351, 0.0
        %v362 = vand.u32 %v351, 2147483648
        %v363 = vsel %vm361, %v362, %v360
        %v364 = vmul.f32 %v363, 0.5
        %v365 = vadd.f32 %v364, -0.5
        %vm366 = vcmp.lt.f32.partialorder %v365, 0.0
        %vm367 = vcmp.gt.f32.partialorder %v365, 8.0
        %vm368 = vmor %vm366, %vm367
        %vm369 = vweird.f32 %v365
        %vm370 = vmor %vm368, %vm369
        %v371 = vfloor.f32 %v365
        %v372 = vsel %vm370, 8.0, %v371
        %v373 = vcvt.f32.s32.to.zero.pseudo %v372
        %vm374 = vcmask 1040384
        %v375 = vsel %vm374, %v216, -inf
        %v376 = vmax.f32 %v214, %v375
        %v377 = vrot.slane %v376, 4
        %v378 = vmax.f32 %v376, %v377
        %v379 = vrot.slane %v378, 2
        %v380 = vmax.f32 %v378, %v379
        %v381 = vrot.slane %v380, 1
        %v382 = vmax.f32 %v380, %v381
        %v383 = vsel %vm374, %v217, -inf
        %v384 = vmax.f32 %v215, %v383
        %v385 = vrot.slane %v384, 4
        %v386 = vmax.f32 %v384, %v385
        %v387 = vrot.slane %v386, 2
        %v388 = vmax.f32 %v386, %v387
        %v389 = vrot.slane %v388, 1
        %v390 = vmax.f32 %v388, %v389
        %v391 = vsub.f32 %v214, %v382
        %v392 = vsub.f32 %v215, %v390
        %v393 = vsub.f32 %v216, %v382
        %v394 = vsub.f32 %v217, %v390
        %v395 = vmul.f32 %v391, 1.442695
        %v396 = vpow.pop %v395
        %v397 = vmul.f32 %v392, 1.442695
        %v398 = vpow.pop %v397
        %v399 = vmul.f32 %v393, 1.442695
        %v400 = vpow.pop %v399
        %v401 = vmul.f32 %v394, 1.442695
        %v402 = vpow.pop %v401
        %v403 = vsel %vm374, %v400, 0.0
        %v404 = vadd.f32 %v396, %v403
        %v405 = vrot.slane %v404, 4
        %v406 = vadd.f32 %v404, %v405
        %v407 = vrot.slane %v406, 2
        %v408 = vadd.f32 %v406, %v407
        %v409 = vrot.slane %v408, 1
        %v410 = vadd.f32 %v408, %v409
        %v411 = vsel %vm374, %v402, 0.0
        %v412 = vadd.f32 %v398, %v411
        %v413 = vrot.slane %v412, 4
        %v414 = vadd.f32 %v412, %v413
        %v415 = vrot.slane %v414, 2
        %v416 = vadd.f32 %v414, %v415
        %v417 = vrot.slane %v416, 1
        %v418 = vadd.f32 %v416, %v417
        %v419 = vrcp.pop %v410
        %v420 = vrcp.pop %v418
        %v421 = vmul.f32 %v396, %v419
        %v422 = vmul.f32 %v398, %v420
        %v423 = vmul.f32 %v400, %v419
        %v424 = vmul.f32 %v402, %v420
        %v425 = vlog2.pop %v410
        %v426 = vmul.f32 %v425, 0.6931472
        %v427 = vlog2.pop %v418
        %v428 = vmul.f32 %v427, 0.6931472
        %v429 = vsub.f32 %v391, %v426
        %v430 = vsub.f32 %v392, %v428
        %v431 = vsub.f32 %v393, %v426
        %v432 = vsub.f32 %v394, %v428
        %v433 = vsub.f32 1.0, %v421
        %v434 = vsub.f32 1.0, %v422
        %v435 = vsub.f32 1.0, %v423
        %v436 = vsub.f32 1.0, %v424
        %v437 = vmul.f32 %v433, %v433
        %v438 = vmul.f32 %v434, %v434
        %v439 = vmul.f32 %v435, %v435
        %v440 = vmul.f32 %v436, %v436
        %v441 = vmul.f32 %v437, %v429
        %v442 = vmul.f32 %v438, %v430
        %v443 = vmul.f32 %v439, %v431
        %v444 = vmul.f32 %v440, %v432
        %v445 = vsub.f32 0.0, %v441
        %v446 = vsub.f32 0.0, %v442
        %v447 = vsub.f32 0.0, %v443
        %v448 = vsub.f32 0.0, %v444
        %v449 = vlaneseq
        %v450 = vshrl.u32 %v449, 7
        %v451 = vadd.s32 %v450, 8
        %v452 = vperm.slane %v373, 0
        %v453 = vperm.slane %v373, 1
        %vm454 = vcmp.eq.s32.totalorder %v450, %v452
        %vm455 = vcmp.eq.s32.totalorder %v450, %v453
        %vm456 = vcmp.eq.s32.totalorder %v451, %v452
        %vm457 = vcmp.eq.s32.totalorder %v451, %v453
        %v458 = vsel %vm454, 1, 0
        %v459 = vsel %vm455, 1, 0
        %v460 = vsel %vm456, 1, 0
        %v461 = vsel %vm457, 1, 0
        %v462 = vcvt.s32.f32 %v458
        %v463 = vcvt.s32.f32 %v459
        %v464 = vcvt.s32.f32 %v460
        %v465 = vcvt.s32.f32 %v461
        %v466 = vadd.f32 %v462, 1e-06
        %v467 = vadd.f32 %v463, 1e-06
        %v468 = vadd.f32 %v464, 1e-06
        %v469 = vadd.f32 %v465, 1e-06
        %v470 = vmul.f32 %v466, %v445
        %v471 = vmul.f32 %v467, %v446
        %v472 = vmul.f32 %v468, %v447
        %v473 = vmul.f32 %v469, %v448
        %v474 = vsel %vm374, %v472, 0.0
        %v475 = vadd.f32 %v470, %v474
        %v476 = vrot.slane %v475, 4
        %v477 = vadd.f32 %v475, %v476
        %v478 = vrot.slane %v477, 2
        %v479 = vadd.f32 %v477, %v478
        %v480 = vrot.slane %v479, 1
        %v481 = vadd.f32 %v479, %v480
        %v482 = vsel %vm374, %v473, 0.0
        %v483 = vadd.f32 %v471, %v482
        %v484 = vrot.slane %v483, 4
        %v485 = vadd.f32 %v483, %v484
        %v486 = vrot.slane %v485, 2
        %v487 = vadd.f32 %v485, %v486
        %v488 = vrot.slane %v487, 1
        %v489 = vadd.f32 %v487, %v488
        %v490 = vsel %vm226, %v481, 0.0
        %v491 = vsel %vm227, %v489, 0.0
        %vm492 = vmand %vm226, %vm339
        %vm493 = vmand %vm227, %vm340
        %v494 = vsel %vm492, 1, 0
        %v495 = vsel %vm493, 1, 0
        %v496 = vcvt.s32.f32 %v494
        %v497 = vcvt.s32.f32 %v495
        %vm498 = vmxor %vm339, 1
        %vm499 = vmxor %vm340, 1
        %vm500 = vmand %vm226, %vm498
        %vm501 = vmand %vm227, %vm499
        %v502 = vsel %vm500, 1, 0
        %v503 = vsel %vm501, 1, 0
        %v504 = vcvt.s32.f32 %v502
        %v505 = vcvt.s32.f32 %v503
        %v506 = vmul.f32 %v490, %v496
        %v507 = vmul.f32 %v491, %v497
        %v508 = vadd.f32 %v506, %v507
        %509 = vadd.xlane.f32.xlu0 %v508
        %v510 = vpop.xlane.xlu0 %509
        %v511 = vmul.f32 %v490, %v504
        %v512 = vmul.f32 %v491, %v505
        %v513 = vadd.f32 %v511, %v512
        %514 = vadd.xlane.f32.xlu0 %v513
        %v515 = vpop.xlane.xlu0 %514
        %vm516 = vcmp.eq.s32.totalorder %v450, 0
        %vm517 = vcmp.eq.s32.totalorder %v220, 0
        %vm518 = vmand %vm516, %vm517
        %v519 = vsel %vm518, %v510, 0.0
        %vm520 = vcmp.eq.s32.totalorder %v220, 1
        %vm521 = vmand %vm516, %vm520
        %v522 = vsel %vm521, %v515, 0.0
        %v523 = vadd.f32 %v519, %v522
        %524 = vst [vmem:[%s194] sm:$0xff] %v523
        %s525 = sand.u32 %s103, 1
        %s526 = scalar_lea.sflag [#allocation5], %s525
        %s527 = sand.u32 %s103, 1
        %s528 = smul.addr %s527, 8
        %s529 = scalar_lea.vmem [#allocation4], %s528
        // Predicated region
        $region29: #{tpu_custom_call.1} parent=27 // pred_check
          %p530 = pneg %p113
        $region30: #{tpu_custom_call.1} parent=27 // pred_check_branch
          %532 = sbr.rel (%p530) target = $region32
        $region31: #{tpu_custom_call.1} parent=27 // pred_region
          %534 = vsyncadd %s526, 0
          %s535 = sadd.s32 %s30, %s29
          %s536 = smul.addr %s535, 8
          %s537 = scalar_lea.hbm %s3, %s536
          %s539 = sshll.u32 %s529, 4
          %s540 = int_to_ptr.vmem [resolvable:$true] %s539
          %s541 = sshll.u32 %s537, 4
          %s542 = int_to_ptr.hbm [resolvable:$true] %s541
          %544 = dma.vmem_to_hbm [thread:$0]  %s540, 128, %s542, %s526
        $region32: #{tpu_custom_call.1} parent=27 // pred_fallthru
          _
      $region28: #{tpu_custom_call.1} parent=5 // pred_fallthru
        _
      %p545 = scmp.le.s32.totalorder 2, %s20
      // Predicated region
      $region33: #{tpu_custom_call.1} parent=5 // pred_check
        %p546 = pneg %p545
      $region34: #{tpu_custom_call.1} parent=5 // pred_check_branch
        %548 = sbr.rel (%p546) target = $region36
      $region35: #{tpu_custom_call.1} parent=5 // pred_region
        %s549 = ssub.s32 %s20, 2
        // Predicated region
        $region37: #{tpu_custom_call.1} parent=35 // pred_check
          %p550 = pneg %p119
        $region38: #{tpu_custom_call.1} parent=35 // pred_check_branch
          %552 = sbr.rel (%p550) target = $region40
        $region39: #{tpu_custom_call.1} parent=35 // pred_region
          %s553 = sand.u32 %s104, 1
          %s554 = scalar_lea.sflag [#allocation5], %s553
          %s555 = sand.u32 %s104, 1
          %s556 = smul.addr %s555, 8
          %s557 = scalar_lea.vmem [#allocation4], %s556
          %559 = dma.done %s554, 128
        $region40: #{tpu_custom_call.1} parent=35 // pred_fallthru
          _
      $region36: #{tpu_custom_call.1} parent=5 // pred_fallthru
        _
    $region6: #{tpu_custom_call.1} parent=1 // loop_footer
      %s24 = sadd.s32 1, %s20
    $region7: #{tpu_custom_call.1} parent=1 // loop_footer_branch
      %19 = sbr.rel target = $region3
    $region8: #{tpu_custom_call.1} parent=1 // loop_exit
      _
    %560 = vsyncpa [#allocation5], 1
    %s561 = scalar_lea.sflag [#allocation5], 1
    %562 = vsyncpa %s561, 1

</llo_original>
